<compile_context>
chip_gen: v7x
topology: tpu7x:2x2x1
jax: 0.10.0
libtpu: 0.0.40
codegen_flags: <defaults>
</compile_context>

<pallas_src>
import math

import jax
import jax.numpy as jnp
from jax import lax
from jax.experimental import pallas as pl
from jax.experimental.pallas import tpu as pltpu


LANE = 128      # feature axes padded to multiples of 128 (lane-dense layout / stores)
SUBLANE = 8     # batch axis padded to a multiple of 8


def _round_up(n, m):
    return ((n + m - 1) // m) * m


def make_ffnet_kernel(num_layers, b_actual, mask_batch):
    """Kernel computing the full MLP forward for ONE output-column block.

    refs: (x_ref, w1_ref, b1_ref, ..., wN_ref, bN_ref, o_ref)
      x_ref : [B_pad, d0_pad]             any float dtype (cast to f32 == x.float())
      wi_ref: [d_out_pad_i, d_in_pad_i]   torch (out, in) layout, native dtype (f32/bf16)
      bi_ref: [1, d_out_pad_i]            f32
      wN_ref: [OUT_BLOCK, d_in_pad_N]     last layer, blocked over output columns
      bN_ref: [1, OUT_BLOCK]
      o_ref : [B_pad, OUT_BLOCK]          f32
    """
    def kernel(*refs):
        x_ref = refs[0]
        o_ref = refs[-1]
        p_refs = refs[1:-1]

        # x.float(): activation / bias / softmax math stays f32 (v5e has no bf16 VPU/EUP);
        # only the MXU operands are handed over in the weights' native dtype.
        out = x_ref[...].astype(jnp.float32)

        for i in range(num_layers):
            w = p_refs[2 * i][...]                         # native dtype -> MXU native rate
            b = p_refs[2 * i + 1][...].astype(jnp.float32)
            # torch layout (out, in): contract activation dim 1 with weight dim 1,
            # so the MXU consumes the transposed operand directly (no wrapper .T).
            acc = lax.dot_general(
                out.astype(w.dtype), w,
                dimension_numbers=(((1,), (1,)), ((), ())),
                preferred_element_type=jnp.float32,
            )
            out = acc + b                                  # nn.Linear
            if i < num_layers - 1:
                out = jnp.maximum(out, 0.0)                # nn.ReLU

        # func.softmax(out, dim=0): softmax over the BATCH axis, per output column.
        if mask_batch:
            # padded batch rows must not contribute to the dim=0 softmax
            row = lax.broadcasted_iota(jnp.int32, out.shape, 0)
            out = jnp.where(row < b_actual, out, -jnp.inf)
        m = jnp.max(out, axis=0, keepdims=True)
        e = jnp.exp(out - m)
        s = jnp.sum(e, axis=0, keepdims=True)
        o_ref[...] = e * pl.reciprocal(s, approx=False)    # EUP reciprocal, exact

    return kernel


def prepare_ffnet_params(weights, biases, param_dtype=jnp.float32):
    """Pad/cast params ONCE (outside the hot path) to lane-dense multiples of 128.

    weights[i]: torch-style (d_out, d_in); biases[i]: (d_out,).
    Weights keep the torch (out, in) layout — no transpose ever happens.
    Zero padding is exact for the Linear/ReLU chain; padded rows/cols are masked or
    sliced off around the softmax.
    """
    p_ws, p_bs = [], []
    for w, b in zip(weights, biases):
        w = jnp.asarray(w)
        b = jnp.asarray(b)
        d_out, d_in = w.shape
        d_out_p, d_in_p = _round_up(d_out, LANE), _round_up(d_in, LANE)
        wp = jnp.zeros((d_out_p, d_in_p), param_dtype).at[:d_out, :d_in].set(
            w.astype(param_dtype))
        bp = jnp.zeros((1, d_out_p), jnp.float32).at[0, :d_out].set(
            b.astype(jnp.float32))
        p_ws.append(wp)
        p_bs.append(bp)
    meta = {"in_dim": int(jnp.asarray(weights[0]).shape[1]),
            "out_dim": int(jnp.asarray(weights[-1]).shape[0])}
    return p_ws, p_bs, meta


def ffnet_forward(x, padded_weights, padded_biases, meta, *, out_block=None):
    """x: [B, in_dim]. Returns f32 [B, out_dim] == softmax(MLP(x), dim=0)."""
    num_layers = len(padded_weights)
    B, d_in = x.shape
    assert d_in == meta["in_dim"], "input feature dim mismatch"
    out_dim = meta["out_dim"]

    B_pad = _round_up(B, SUBLANE)
    d0_pad = padded_weights[0].shape[1]
    out_pad = padded_weights[-1].shape[0]

    # Pad activations (cheap, per call). Zero padding is exact for Linear/ReLU;
    # padded batch rows are masked inside the kernel before the dim=0 softmax.
    xp = jnp.zeros((B_pad, d0_pad), x.dtype).at[:B, :d_in].set(x)

    # Grid over the LAST layer's output columns (softmax over dim=0 is independent
    # per column) -> lane-dense output stores, and a "parallel" axis so v7x's two
    # TensorCores both get work. Hidden layers stay VMEM-resident across the grid
    # (same block index every step => no re-DMA).
    if out_block is None:
        out_block = 256 if out_pad % 256 == 0 else LANE
    num_blocks = out_pad // out_block

    operands = [xp]
    in_specs = [pl.BlockSpec((B_pad, d0_pad), lambda j: (0, 0))]
    for i, (w, b) in enumerate(zip(padded_weights, padded_biases)):
        if i < num_layers - 1:
            in_specs.append(pl.BlockSpec(w.shape, lambda j: (0, 0)))
            in_specs.append(pl.BlockSpec(b.shape, lambda j: (0, 0)))
        else:
            in_specs.append(pl.BlockSpec((out_block, w.shape[1]), lambda j: (j, 0)))
            in_specs.append(pl.BlockSpec((1, out_block), lambda j: (0, j)))
        operands.append(w)
        operands.append(b)

    out_spec = pl.BlockSpec((B_pad, out_block), lambda j: (0, j))

    kernel = make_ffnet_kernel(num_layers, B, mask_batch=(B_pad != B))

    # Explicit VMEM budget (double-buffered inputs + output) with headroom,
    # capped well below v7x's 64 MiB physical VMEM.
    vmem_need = sum(int(op.size) * op.dtype.itemsize for op in operands)
    vmem_need = 2 * (vmem_need + B_pad * out_block * 4) + (1 << 20)
    vmem_limit = int(min(max(vmem_need, 16 << 20), 48 << 20))

    out_padded = pl.pallas_call(
        kernel,
        out_shape=jax.ShapeDtypeStruct((B_pad, out_pad), jnp.float32),
        grid=(num_blocks,),
        in_specs=in_specs,
        out_specs=out_spec,
        compiler_params=pltpu.CompilerParams(
            dimension_semantics=("parallel",),
            vmem_limit_bytes=vmem_limit,
        ),
    )(*operands)

    return out_padded[:B, :out_dim]


def init_linear_params(key, dims):
    """Deterministic init matching torch.nn.Linear default: U(-1/sqrt(fan_in), +)."""
    weights, biases = [], []
    for i in range(len(dims) - 1):
        fan_in, fan_out = dims[i], dims[i + 1]
        key, kw, kb = jax.random.split(key, 3)
        bound = 1.0 / math.sqrt(fan_in)
        w = jax.random.uniform(kw, (fan_out, fan_in), jnp.float32, -bound, bound)
        b = jax.random.uniform(kb, (fan_out,), jnp.float32, -bound, bound)
        weights.append(w)
        biases.append(b)
    return weights, biases


def reference_forward(x, weights, biases):
    """Pure-JAX reference matching the PyTorch forward exactly."""
    out = x.astype(jnp.float32)
    n = len(weights)
    for i in range(n):
        out = out @ weights[i].T + biases[i]
        if i < n - 1:
            out = jnp.maximum(out, 0.0)
    return jax.nn.softmax(out, axis=0)  # dim=0 as in the module


if __name__ == "__main__":
    # FFNet(dim=[16, 32, 32, 8]); batch=128 amortizes launch overhead & fills MXU rows.
    dims = [16, 32, 32, 8]
    batch = 128

    key = jax.random.PRNGKey(0)
    key, kx = jax.random.split(key)
    x = jax.random.normal(kx, (batch, dims[0]), jnp.float32)

    weights, biases = init_linear_params(key, dims)
    ref = reference_forward(x, weights, biases)

    # f32-weight path: matches torch `x.float()` semantics to 1e-5.
    p_w32, p_b32, meta = prepare_ffnet_params(weights, biases, jnp.float32)
    out32 = jax.block_until_ready(ffnet_forward(x, p_w32, p_b32, meta))
    assert out32.shape == (batch, dims[-1])
    assert jnp.allclose(out32, ref, atol=1e-5, rtol=1e-5), "f32 mismatch vs reference"

    # bf16-weight path: MXU consumes bf16 directly; bias/ReLU/softmax stay f32.
    p_wbf, p_bbf, _ = prepare_ffnet_params(weights, biases, jnp.bfloat16)
    outbf = jax.block_until_ready(ffnet_forward(x, p_wbf, p_bbf, meta))
    assert outbf.shape == (batch, dims[-1])
    assert jnp.allclose(outbf, ref, atol=2e-2), "bf16 mismatch vs reference"
    assert jnp.allclose(jnp.sum(outbf, axis=0), 1.0, atol=1e-3), "softmax not normalized"

    # Ragged batch (exercises in-kernel masking of padded rows for the dim=0 softmax).
    x_odd = x[:13]
    out_odd = jax.block_until_ready(ffnet_forward(x_odd, p_w32, p_b32, meta))
    ref_odd = reference_forward(x_odd, weights, biases)
    assert jnp.allclose(out_odd, ref_odd, atol=1e-5, rtol=1e-5), "odd-batch mismatch"

    print("KERNEL_OK")
</pallas_src>

<mosaic_0001>
module attributes {stable_mosaic.version = 11 : i64} {
  func.func @kernel(%arg0: i32, %arg1: memref<128x128xf32, #tpu.memory_space<vmem>>, %arg2: memref<128x128xf32, #tpu.memory_space<vmem>>, %arg3: memref<1x128xf32, #tpu.memory_space<vmem>>, %arg4: memref<128x128xf32, #tpu.memory_space<vmem>>, %arg5: memref<1x128xf32, #tpu.memory_space<vmem>>, %arg6: memref<128x128xf32, #tpu.memory_space<vmem>>, %arg7: memref<1x128xf32, #tpu.memory_space<vmem>>, %arg8: memref<128x128xf32, #tpu.memory_space<vmem>>) attributes {dimension_semantics = [#tpu.dimension_semantics<parallel>], iteration_bounds = array<i64: 1>, scalar_prefetch = 0 : i64, scratch_operands = 0 : i64, tpu.core_type = #tpu.core_type<tc>, window_params = [{pipeline_mode = #tpu.pipeline_mode<synchronous>, transform_indices = @transform_0, window_bounds = array<i64: 128, 128>}, {pipeline_mode = #tpu.pipeline_mode<synchronous>, transform_indices = @transform_1, window_bounds = array<i64: 128, 128>}, {pipeline_mode = #tpu.pipeline_mode<synchronous>, transform_indices = @transform_2, window_bounds = array<i64: 1, 128>}, {pipeline_mode = #tpu.pipeline_mode<synchronous>, transform_indices = @transform_3, window_bounds = array<i64: 128, 128>}, {pipeline_mode = #tpu.pipeline_mode<synchronous>, transform_indices = @transform_4, window_bounds = array<i64: 1, 128>}, {transform_indices = @transform_5, window_bounds = array<i64: 128, 128>}, {transform_indices = @transform_6, window_bounds = array<i64: 1, 128>}, {transform_indices = @transform_7, window_bounds = array<i64: 128, 128>}]} {
    %c0 = arith.constant 0 : index
    %c0_0 = arith.constant 0 : index
    %0 = vector.load %arg1[%c0, %c0_0] : memref<128x128xf32, #tpu.memory_space<vmem>>, vector<128x128xf32>
    %c0_1 = arith.constant 0 : index
    %c0_2 = arith.constant 0 : index
    %1 = vector.load %arg2[%c0_1, %c0_2] : memref<128x128xf32, #tpu.memory_space<vmem>>, vector<128x128xf32>
    %c0_3 = arith.constant 0 : index
    %c0_4 = arith.constant 0 : index
    %2 = vector.load %arg3[%c0_3, %c0_4] : memref<1x128xf32, #tpu.memory_space<vmem>>, vector<1x128xf32>
    %cst = arith.constant dense<0.000000e+00> : vector<128x128xf32>
    %3 = tpu.matmul %0, %1, %cst {dimension_numbers = #tpu.dot_dimension_numbers<[1], [1], [0], [0], [0, 0, 1, 0], [], []>} : vector<128x128xf32>, vector<128x128xf32>, vector<128x128xf32> -> vector<128x128xf32>
    %4 = vector.broadcast %2 : vector<1x128xf32> to vector<128x128xf32>
    %5 = arith.addf %3, %4 : vector<128x128xf32>
    %cst_5 = arith.constant 0.000000e+00 : f32
    %6 = vector.broadcast %cst_5 : f32 to vector<128x128xf32>
    %7 = arith.maximumf %5, %6 : vector<128x128xf32>
    %c0_6 = arith.constant 0 : index
    %c0_7 = arith.constant 0 : index
    %8 = vector.load %arg4[%c0_6, %c0_7] : memref<128x128xf32, #tpu.memory_space<vmem>>, vector<128x128xf32>
    %c0_8 = arith.constant 0 : index
    %c0_9 = arith.constant 0 : index
    %9 = vector.load %arg5[%c0_8, %c0_9] : memref<1x128xf32, #tpu.memory_space<vmem>>, vector<1x128xf32>
    %cst_10 = arith.constant dense<0.000000e+00> : vector<128x128xf32>
    %10 = tpu.matmul %7, %8, %cst_10 {dimension_numbers = #tpu.dot_dimension_numbers<[1], [1], [0], [0], [0, 0, 1, 0], [], []>} : vector<128x128xf32>, vector<128x128xf32>, vector<128x128xf32> -> vector<128x128xf32>
    %11 = vector.broadcast %9 : vector<1x128xf32> to vector<128x128xf32>
    %12 = arith.addf %10, %11 : vector<128x128xf32>
    %cst_11 = arith.constant 0.000000e+00 : f32
    %13 = vector.broadcast %cst_11 : f32 to vector<128x128xf32>
    %14 = arith.maximumf %12, %13 : vector<128x128xf32>
    %c0_12 = arith.constant 0 : index
    %c0_13 = arith.constant 0 : index
    %15 = vector.load %arg6[%c0_12, %c0_13] : memref<128x128xf32, #tpu.memory_space<vmem>>, vector<128x128xf32>
    %c0_14 = arith.constant 0 : index
    %c0_15 = arith.constant 0 : index
    %16 = vector.load %arg7[%c0_14, %c0_15] : memref<1x128xf32, #tpu.memory_space<vmem>>, vector<1x128xf32>
    %cst_16 = arith.constant dense<0.000000e+00> : vector<128x128xf32>
    %17 = tpu.matmul %14, %15, %cst_16 {dimension_numbers = #tpu.dot_dimension_numbers<[1], [1], [0], [0], [0, 0, 1, 0], [], []>} : vector<128x128xf32>, vector<128x128xf32>, vector<128x128xf32> -> vector<128x128xf32>
    %18 = vector.broadcast %16 : vector<1x128xf32> to vector<128x128xf32>
    %19 = arith.addf %17, %18 : vector<128x128xf32>
    %cst_17 = arith.constant dense<0xFF800000> : vector<128xf32>
    %20 = vector.multi_reduction <maximumf>, %19, %cst_17 [0] : vector<128x128xf32> to vector<128xf32>
    %21 = vector.shape_cast %20 : vector<128xf32> to vector<1x128xf32>
    %22 = vector.broadcast %21 : vector<1x128xf32> to vector<128x128xf32>
    %23 = arith.subf %19, %22 : vector<128x128xf32>
    %24 = math.exp %23 : vector<128x128xf32>
    %cst_18 = arith.constant dense<0.000000e+00> : vector<128xf32>
    %25 = vector.multi_reduction <add>, %24, %cst_18 [0] : vector<128x128xf32> to vector<128xf32>
    %26 = vector.shape_cast %25 : vector<128xf32> to vector<1x128xf32>
    %27 = tpu.reciprocal %26 : vector<1x128xf32> -> vector<1x128xf32>
    %28 = vector.broadcast %27 : vector<1x128xf32> to vector<128x128xf32>
    %29 = arith.mulf %24, %28 : vector<128x128xf32>
    %c0_19 = arith.constant 0 : index
    %c0_20 = arith.constant 0 : index
    %30 = vector.load %arg8[%c0_19, %c0_20] : memref<128x128xf32, #tpu.memory_space<vmem>>, vector<128x128xf32>
    tpu.vector_store %arg8[%c0_19, %c0_20], %29 {strides = array<i32>} : memref<128x128xf32, #tpu.memory_space<vmem>>, vector<128x128xf32>,
    return
  }
  func.func @transform_0(%arg0: i32) -> (i32, i32) {
    %c0_i32 = arith.constant 0 : i32
    %c0_i32_0 = arith.constant 0 : i32
    %c0_i32_1 = arith.constant 0 : i32
    return %c0_i32, %c0_i32_0 : i32, i32
  }
  func.func @transform_1(%arg0: i32) -> (i32, i32) {
    %c0_i32 = arith.constant 0 : i32
    %c0_i32_0 = arith.constant 0 : i32
    %c0_i32_1 = arith.constant 0 : i32
    return %c0_i32, %c0_i32_0 : i32, i32
  }
  func.func @transform_2(%arg0: i32) -> (i32, i32) {
    %c0_i32 = arith.constant 0 : i32
    %c0_i32_0 = arith.constant 0 : i32
    %c0_i32_1 = arith.constant 0 : i32
    return %c0_i32, %c0_i32_0 : i32, i32
  }
  func.func @transform_3(%arg0: i32) -> (i32, i32) {
    %c0_i32 = arith.constant 0 : i32
    %c0_i32_0 = arith.constant 0 : i32
    %c0_i32_1 = arith.constant 0 : i32
    return %c0_i32, %c0_i32_0 : i32, i32
  }
  func.func @transform_4(%arg0: i32) -> (i32, i32) {
    %c0_i32 = arith.constant 0 : i32
    %c0_i32_0 = arith.constant 0 : i32
    %c0_i32_1 = arith.constant 0 : i32
    return %c0_i32, %c0_i32_0 : i32, i32
  }
  func.func @transform_5(%arg0: i32) -> (i32, i32) {
    %c0_i32 = arith.constant 0 : i32
    %c0_i32_0 = arith.constant 0 : i32
    return %arg0, %c0_i32 : i32, i32
  }
  func.func @transform_6(%arg0: i32) -> (i32, i32) {
    %c0_i32 = arith.constant 0 : i32
    %c0_i32_0 = arith.constant 0 : i32
    return %c0_i32, %arg0 : i32, i32
  }
  func.func @transform_7(%arg0: i32) -> (i32, i32) {
    %c0_i32 = arith.constant 0 : i32
    %c0_i32_0 = arith.constant 0 : i32
    return %c0_i32, %arg0 : i32, i32
  }
}

</mosaic_0001>

<llo_original>
// kernel: tpu_custom_call.1
$region0: #{tpu_custom_call.1}
  #allocation0 [shape = 'u32[]', space=smem, size = 0x4, offset = 0x4, fixed_abs, tag = 'smem constant byte address 0x4 - core index']
  #allocation1 [shape = 'u32[144,128]{1,0:T(1,128)}', space=vmem, size = 0x12000, scoped, tag = 'internal scratch']
  %s0 = inlined_call_operand.hbm [shape: f32[128,128], index: 0, kind: input, shape index: {}]
  %s1 = inlined_call_operand.hbm [shape: f32[128,128], index: 1, kind: input, shape index: {}]
  %s2 = inlined_call_operand.vmem [shape: f32[1,128], index: 2, kind: input, shape index: {}]
  %s3 = inlined_call_operand.hbm [shape: f32[128,128], index: 3, kind: input, shape index: {}]
  %s4 = inlined_call_operand.vmem [shape: f32[1,128], index: 4, kind: input, shape index: {}]
  %s5 = inlined_call_operand.hbm [shape: f32[128,128], index: 5, kind: input, shape index: {}]
  %s6 = inlined_call_operand.vmem [shape: f32[1,128], index: 6, kind: input, shape index: {}]
  %s7 = inlined_call_operand.hbm [shape: f32[128,128], index: 7, kind: output, shape index: {}]
  %s8 = sld [smem:[#allocation0]]
  $region54: #{tpu_custom_call.1} parent=0
    _
  %s10 = ssub.s32 1, %s8
  %s11 = scalar_select 0, %s10, %s8
  $region1: #{tpu_custom_call.1} parent=0
    #allocation2 [shape = 'u8[65536]{0}', space=vmem, size = 0x10000, scoped, tag = 'input window, operand 0, single buffered']
    #allocation3 [shape = 's32[1]{0}', space=sflag, size = 0x4, scoped, tag = 'scoped memory for tpu_custom_call.1']
    #allocation4 [shape = 's32[1]{0}', space=sflag, size = 0x4, scoped, tag = 'scoped memory for tpu_custom_call.1']
    #allocation5 [shape = 'u8[65536]{0}', space=vmem, size = 0x10000, scoped, tag = 'input window, operand 1, single buffered']
    #allocation6 [shape = 's32[1]{0}', space=sflag, size = 0x4, scoped, tag = 'scoped memory for tpu_custom_call.1']
    #allocation7 [shape = 'u8[65536]{0}', space=vmem, size = 0x10000, scoped, tag = 'input window, operand 3, single buffered']
    #allocation8 [shape = 'u8[65536]{0}', space=vmem, size = 0x10000, scoped, tag = 'input window, operand 5, single buffered']
    #allocation9 [shape = 's32[1]{0}', space=sflag, size = 0x4, scoped, tag = 'scoped memory for tpu_custom_call.1']
    #allocation10 [shape = 'u8[65536]{0}', space=vmem, size = 0x10000, scoped, tag = 'output window, operand 0, single buffered']
    %12 = vsyncpa [#allocation3], 0
    %13 = vsyncpa [#allocation6], 0
    %14 = vsyncpa [#allocation9], 0
    %15 = vsyncpa [#allocation4], 0
    // Predicated region
    $region2: #{tpu_custom_call.1} parent=1 // pred_check
      _
    $region3: #{tpu_custom_call.1} parent=1 // pred_check_branch
      %17 = sbr.rel (0) target = $region5
    $region4: #{tpu_custom_call.1} parent=1 // pred_region
      %s19 = ssub.s32 2048, 2048
      %20 = vsyncadd [#allocation3], %s19
      %s21 = sshll.u32 [#allocation2], 4
      %s22 = int_to_ptr.vmem [resolvable:$true] %s21
      %27 = dma.hbm_to_vmem [thread:$0]  %s0, 2048, %s22, [#allocation3], 128, 128, 8
    $region5: #{tpu_custom_call.1} parent=1 // pred_fallthru
      _
    // Predicated region
    $region6: #{tpu_custom_call.1} parent=1 // pred_check
      _
    $region7: #{tpu_custom_call.1} parent=1 // pred_check_branch
      %29 = sbr.rel (0) target = $region9
    $region8: #{tpu_custom_call.1} parent=1 // pred_region
      %s31 = ssub.s32 2048, 2048
      %32 = vsyncadd [#allocation6], %s31
      %s33 = sshll.u32 [#allocation5], 4
      %s34 = int_to_ptr.vmem [resolvable:$true] %s33
      %39 = dma.hbm_to_vmem [thread:$0]  %s1, 2048, %s34, [#allocation6], 128, 128, 8
    $region9: #{tpu_custom_call.1} parent=1 // pred_fallthru
      _
    // Predicated region
    $region10: #{tpu_custom_call.1} parent=1 // pred_check
      _
    $region11: #{tpu_custom_call.1} parent=1 // pred_check_branch
      %41 = sbr.rel (0) target = $region13
    $region12: #{tpu_custom_call.1} parent=1 // pred_region
      _
    $region13: #{tpu_custom_call.1} parent=1 // pred_fallthru
      _
    // Predicated region
    $region14: #{tpu_custom_call.1} parent=1 // pred_check
      _
    $region15: #{tpu_custom_call.1} parent=1 // pred_check_branch
      %43 = sbr.rel (0) target = $region17
    $region16: #{tpu_custom_call.1} parent=1 // pred_region
      %s45 = ssub.s32 2048, 2048
      %46 = vsyncadd [#allocation6], %s45
      %s47 = sshll.u32 [#allocation7], 4
      %s48 = int_to_ptr.vmem [resolvable:$true] %s47
      %53 = dma.hbm_to_vmem [thread:$0]  %s3, 2048, %s48, [#allocation6], 128, 128, 8
    $region17: #{tpu_custom_call.1} parent=1 // pred_fallthru
      _
    // Predicated region
    $region18: #{tpu_custom_call.1} parent=1 // pred_check
      _
    $region19: #{tpu_custom_call.1} parent=1 // pred_check_branch
      %55 = sbr.rel (0) target = $region21
    $region20: #{tpu_custom_call.1} parent=1 // pred_region
      _
    $region21: #{tpu_custom_call.1} parent=1 // pred_fallthru
      _
    // Predicated region
    $region22: #{tpu_custom_call.1} parent=1 // pred_check
      _
    $region23: #{tpu_custom_call.1} parent=1 // pred_check_branch
      %57 = sbr.rel (0) target = $region25
    $region24: #{tpu_custom_call.1} parent=1 // pred_region
      %s59 = ssub.s32 2048, 2048
      %60 = vsyncadd [#allocation9], %s59
      %s61 = sshll.u32 [#allocation8], 4
      %s62 = int_to_ptr.vmem [resolvable:$true] %s61
      %67 = dma.hbm_to_vmem [thread:$0]  %s5, 2048, %s62, [#allocation9], 128, 128, 8
    $region25: #{tpu_custom_call.1} parent=1 // pred_fallthru
      _
    // Predicated region
    $region26: #{tpu_custom_call.1} parent=1 // pred_check
      _
    $region27: #{tpu_custom_call.1} parent=1 // pred_check_branch
      %69 = sbr.rel (0) target = $region29
    $region28: #{tpu_custom_call.1} parent=1 // pred_region
      _
    $region29: #{tpu_custom_call.1} parent=1 // pred_fallthru
      _
    // Predicated region
    $region30: #{tpu_custom_call.1} parent=1 // pred_check
      _
    $region31: #{tpu_custom_call.1} parent=1 // pred_check_branch
      %71 = sbr.rel (0) target = $region33
    $region32: #{tpu_custom_call.1} parent=1 // pred_region
      %72 = dma.done [#allocation3], 2048
    $region33: #{tpu_custom_call.1} parent=1 // pred_fallthru
      _
    // Predicated region
    $region34: #{tpu_custom_call.1} parent=1 // pred_check
      _
    $region35: #{tpu_custom_call.1} parent=1 // pred_check_branch
      %74 = sbr.rel (0) target = $region37
    $region36: #{tpu_custom_call.1} parent=1 // pred_region
      %75 = dma.done [#allocation6], 2048
    $region37: #{tpu_custom_call.1} parent=1 // pred_fallthru
      _
    // Predicated region
    $region38: #{tpu_custom_call.1} parent=1 // pred_check
      _
    $region39: #{tpu_custom_call.1} parent=1 // pred_check_branch
      %77 = sbr.rel (0) target = $region41
    $region40: #{tpu_custom_call.1} parent=1 // pred_region
      %78 = dma.done [#allocation6], 2048
    $region41: #{tpu_custom_call.1} parent=1 // pred_fallthru
      _
    // Predicated region
    $region42: #{tpu_custom_call.1} parent=1 // pred_check
      _
    $region43: #{tpu_custom_call.1} parent=1 // pred_check_branch
      %80 = sbr.rel (0) target = $region45
    $region44: #{tpu_custom_call.1} parent=1 // pred_region
      %81 = dma.done [#allocation9], 2048
    $region45: #{tpu_custom_call.1} parent=1 // pred_fallthru
      _
    %v82 = vld [vmem:[#allocation2] sm:$0xff]
    %v83 = vld [vmem:[#allocation2 + $0x8] sm:$0xff]
    %v84 = vld [vmem:[#allocation2 + $0x10] sm:$0xff]
    %v85 = vld [vmem:[#allocation2 + $0x18] sm:$0xff]
    %v86 = vld [vmem:[#allocation2 + $0x20] sm:$0xff]
    %v87 = vld [vmem:[#allocation2 + $0x28] sm:$0xff]
    %v88 = vld [vmem:[#allocation2 + $0x30] sm:$0xff]
    %v89 = vld [vmem:[#allocation2 + $0x38] sm:$0xff]
    %v90 = vld [vmem:[#allocation2 + $0x40] sm:$0xff]
    %v91 = vld [vmem:[#allocation2 + $0x48] sm:$0xff]
    %v92 = vld [vmem:[#allocation2 + $0x50] sm:$0xff]
    %v93 = vld [vmem:[#allocation2 + $0x58] sm:$0xff]
    %v94 = vld [vmem:[#allocation2 + $0x60] sm:$0xff]
    %v95 = vld [vmem:[#allocation2 + $0x68] sm:$0xff]
    %v96 = vld [vmem:[#allocation2 + $0x70] sm:$0xff]
    %v97 = vld [vmem:[#allocation2 + $0x78] sm:$0xff]
    %v98 = vld [vmem:[#allocation5] sm:$0xff]
    %v99 = vld [vmem:[#allocation5 + $0x8] sm:$0xff]
    %v100 = vld [vmem:[#allocation5 + $0x10] sm:$0xff]
    %v101 = vld [vmem:[#allocation5 + $0x18] sm:$0xff]
    %v102 = vld [vmem:[#allocation5 + $0x20] sm:$0xff]
    %v103 = vld [vmem:[#allocation5 + $0x28] sm:$0xff]
    %v104 = vld [vmem:[#allocation5 + $0x30] sm:$0xff]
    %v105 = vld [vmem:[#allocation5 + $0x38] sm:$0xff]
    %v106 = vld [vmem:[#allocation5 + $0x40] sm:$0xff]
    %v107 = vld [vmem:[#allocation5 + $0x48] sm:$0xff]
    %v108 = vld [vmem:[#allocation5 + $0x50] sm:$0xff]
    %v109 = vld [vmem:[#allocation5 + $0x58] sm:$0xff]
    %v110 = vld [vmem:[#allocation5 + $0x60] sm:$0xff]
    %v111 = vld [vmem:[#allocation5 + $0x68] sm:$0xff]
    %v112 = vld [vmem:[#allocation5 + $0x70] sm:$0xff]
    %v113 = vld [vmem:[#allocation5 + $0x78] sm:$0xff]
    %v114 = vld [vmem:[%s2] sm:$0x1]
    %v116 = vlaneseq
    %v117 = vshrl.u32 %v116, 7
    %v118 = vsub.s32 0, %v117
    %v119 = vrot.slane %v114, %v118
    %121 = vmatprep.subr.mxu0 0.0
    %122 = vmatpush1.xpose.msra.mxu0 %v98
    %123 = vmatprep.subr.mxu0 0.0
    %124 = vmatpush1.xpose.msra.mxu0 %v99
    %125 = vmatprep.subr.mxu0 0.0
    %126 = vmatpush1.xpose.msra.mxu0 %v100
    %127 = vmatprep.subr.mxu0 0.0
    %128 = vmatpush1.xpose.msra.mxu0 %v101
    %129 = vmatprep.subr.mxu0 0.0
    %130 = vmatpush1.xpose.msra.mxu0 %v102
    %131 = vmatprep.subr.mxu0 0.0
    %132 = vmatpush1.xpose.msra.mxu0 %v103
    %133 = vmatprep.subr.mxu0 0.0
    %134 = vmatpush1.xpose.msra.mxu0 %v104
    %135 = vmatprep.subr.mxu0 0.0
    %136 = vmatpush1.xpose.msra.mxu0 %v105
    %137 = vmatprep.subr.mxu0 0.0
    %138 = vmatpush1.xpose.msra.mxu0 %v106
    %139 = vmatprep.subr.mxu0 0.0
    %140 = vmatpush1.xpose.msra.mxu0 %v107
    %141 = vmatprep.subr.mxu0 0.0
    %142 = vmatpush1.xpose.msra.mxu0 %v108
    %143 = vmatprep.subr.mxu0 0.0
    %144 = vmatpush1.xpose.msra.mxu0 %v109
    %145 = vmatprep.subr.mxu0 0.0
    %146 = vmatpush1.xpose.msra.mxu0 %v110
    %147 = vmatprep.subr.mxu0 0.0
    %148 = vmatpush1.xpose.msra.mxu0 %v111
    %149 = vmatprep.subr.mxu0 0.0
    %150 = vmatpush1.xpose.msra.mxu0 %v112
    %151 = vmatprep.subr.mxu0 0.0
    %152 = vmatpush1.xpose.msra.mxu0 %v113
    %153 = vmatprep.subr.mxu0 0.0
    %154 = vmatpush1.xpose.msra.mxu0 0.0
    %155 = vmatprep.subr.mxu0 0.0
    %156 = vmatpush1.xpose.msra.mxu0 0.0
    %157 = vmatprep.subr.mxu0 0.0
    %158 = vmatpush1.xpose.msra.mxu0 0.0
    %159 = vmatprep.subr.mxu0 0.0
    %160 = vmatpush1.xpose.msra.mxu0 0.0
    %161 = vmatprep.subr.mxu0 0.0
    %162 = vmatpush1.xpose.msra.mxu0 0.0
    %163 = vmatprep.subr.mxu0 0.0
    %164 = vmatpush1.xpose.msra.mxu0 0.0
    %165 = vmatprep.subr.mxu0 0.0
    %166 = vmatpush1.xpose.msra.mxu0 0.0
    %167 = vmatprep.subr.mxu0 0.0
    %168 = vmatpush1.xpose.msra.mxu0 0.0
    %169 = vmatprep.subr.mxu0 0.0
    %170 = vmatpush1.xpose.msra.mxu0 0.0
    %171 = vmatprep.subr.mxu0 0.0
    %172 = vmatpush1.xpose.msra.mxu0 0.0
    %173 = vmatprep.subr.mxu0 0.0
    %174 = vmatpush1.xpose.msra.mxu0 0.0
    %175 = vmatprep.subr.mxu0 0.0
    %176 = vmatpush1.xpose.msra.mxu0 0.0
    %177 = vmatprep.subr.mxu0 0.0
    %178 = vmatpush1.xpose.msra.mxu0 0.0
    %179 = vmatprep.subr.mxu0 0.0
    %180 = vmatpush1.xpose.msra.mxu0 0.0
    %181 = vmatprep.subr.mxu0 0.0
    %182 = vmatpush1.xpose.msra.mxu0 0.0
    %183 = vmatprep.subr.mxu0 0.0
    %184 = vmatpush1.xpose.msra.mxu0 0.0
    %185 = vmatprep.mubr.f32.mxu0 0.0
    %186 = vmatmul.mubr.f32.gmra.mrb[0].mxu0 %v82
    %v187 = vpop.f32.mrb[0].mxu0
    %v188 = vadd.f32 %v119, %v187
    %v189 = vpop.f32.mrb[0].mxu0
    %190 = vmatprep.mubr.f32.mxu0 0.0
    %191 = vmatmul.mubr.f32.gmra.mrb[0].mxu0 %v83
    %v192 = vpop.f32.mrb[0].mxu0
    %v193 = vadd.f32 %v119, %v192
    %v194 = vpop.f32.mrb[0].mxu0
    %195 = vmatprep.mubr.f32.mxu0 0.0
    %196 = vmatmul.mubr.f32.gmra.mrb[0].mxu0 %v84
    %v197 = vpop.f32.mrb[0].mxu0
    %v198 = vadd.f32 %v119, %v197
    %v199 = vpop.f32.mrb[0].mxu0
    %200 = vmatprep.mubr.f32.mxu0 0.0
    %201 = vmatmul.mubr.f32.gmra.mrb[0].mxu0 %v85
    %v202 = vpop.f32.mrb[0].mxu0
    %v203 = vadd.f32 %v119, %v202
    %v204 = vpop.f32.mrb[0].mxu0
    %205 = vmatprep.mubr.f32.mxu0 0.0
    %206 = vmatmul.mubr.f32.gmra.mrb[0].mxu0 %v86
    %v207 = vpop.f32.mrb[0].mxu0
    %v208 = vadd.f32 %v119, %v207
    %v209 = vpop.f32.mrb[0].mxu0
    %210 = vmatprep.mubr.f32.mxu0 0.0
    %211 = vmatmul.mubr.f32.gmra.mrb[0].mxu0 %v87
    %v212 = vpop.f32.mrb[0].mxu0
    %v213 = vadd.f32 %v119, %v212
    %v214 = vpop.f32.mrb[0].mxu0
    %215 = vmatprep.mubr.f32.mxu0 0.0
    %216 = vmatmul.mubr.f32.gmra.mrb[0].mxu0 %v88
    %v217 = vpop.f32.mrb[0].mxu0
    %v218 = vadd.f32 %v119, %v217
    %v219 = vpop.f32.mrb[0].mxu0
    %220 = vmatprep.mubr.f32.mxu0 0.0
    %221 = vmatmul.mubr.f32.gmra.mrb[0].mxu0 %v89
    %v222 = vpop.f32.mrb[0].mxu0
    %v223 = vadd.f32 %v119, %v222
    %v224 = vpop.f32.mrb[0].mxu0
    %225 = vmatprep.mubr.f32.mxu0 0.0
    %226 = vmatmul.mubr.f32.gmra.mrb[0].mxu0 %v90
    %v227 = vpop.f32.mrb[0].mxu0
    %v228 = vadd.f32 %v119, %v227
    %v229 = vpop.f32.mrb[0].mxu0
    %230 = vmatprep.mubr.f32.mxu0 0.0
    %231 = vmatmul.mubr.f32.gmra.mrb[0].mxu0 %v91
    %v232 = vpop.f32.mrb[0].mxu0
    %v233 = vadd.f32 %v119, %v232
    %v234 = vpop.f32.mrb[0].mxu0
    %235 = vmatprep.mubr.f32.mxu0 0.0
    %236 = vmatmul.mubr.f32.gmra.mrb[0].mxu0 %v92
    %v237 = vpop.f32.mrb[0].mxu0
    %v238 = vadd.f32 %v119, %v237
    %v239 = vpop.f32.mrb[0].mxu0
    %240 = vmatprep.mubr.f32.mxu0 0.0
    %241 = vmatmul.mubr.f32.gmra.mrb[0].mxu0 %v93
    %v242 = vpop.f32.mrb[0].mxu0
    %v243 = vadd.f32 %v119, %v242
    %v244 = vpop.f32.mrb[0].mxu0
    %245 = vmatprep.mubr.f32.mxu0 0.0
    %246 = vmatmul.mubr.f32.gmra.mrb[0].mxu0 %v94
    %v247 = vpop.f32.mrb[0].mxu0
    %v248 = vadd.f32 %v119, %v247
    %v249 = vpop.f32.mrb[0].mxu0
    %250 = vmatprep.mubr.f32.mxu0 0.0
    %251 = vmatmul.mubr.f32.gmra.mrb[0].mxu0 %v95
    %v252 = vpop.f32.mrb[0].mxu0
    %v253 = vadd.f32 %v119, %v252
    %v254 = vpop.f32.mrb[0].mxu0
    %255 = vmatprep.mubr.f32.mxu0 0.0
    %256 = vmatmul.mubr.f32.gmra.mrb[0].mxu0 %v96
    %v257 = vpop.f32.mrb[0].mxu0
    %v258 = vadd.f32 %v119, %v257
    %v259 = vpop.f32.mrb[0].mxu0
    %260 = vmatprep.mubr.f32.mxu0 0.0
    %261 = vmatmul.mubr.f32.gmra.mrb[0].mxu0 %v97
    %v262 = vpop.f32.mrb[0].mxu0
    %v263 = vadd.f32 %v119, %v262
    %v264 = vpop.f32.mrb[0].mxu0
    %265 = vdwg.mxu0
    %v266 = vmax.f32 %v188, 0.0
    %v267 = vmax.f32 %v193, 0.0
    %v268 = vmax.f32 %v198, 0.0
    %v269 = vmax.f32 %v203, 0.0
    %v270 = vmax.f32 %v208, 0.0
    %v271 = vmax.f32 %v213, 0.0
    %v272 = vmax.f32 %v218, 0.0
    %v273 = vmax.f32 %v223, 0.0
    %v274 = vmax.f32 %v228, 0.0
    %v275 = vmax.f32 %v233, 0.0
    %v276 = vmax.f32 %v238, 0.0
    %v277 = vmax.f32 %v243, 0.0
    %v278 = vmax.f32 %v248, 0.0
    %v279 = vmax.f32 %v253, 0.0
    %v280 = vmax.f32 %v258, 0.0
    %v281 = vmax.f32 %v263, 0.0
    %v282 = vld [vmem:[#allocation7] sm:$0xff]
    %v283 = vld [vmem:[#allocation7 + $0x8] sm:$0xff]
    %v284 = vld [vmem:[#allocation7 + $0x10] sm:$0xff]
    %v285 = vld [vmem:[#allocation7 + $0x18] sm:$0xff]
    %v286 = vld [vmem:[#allocation7 + $0x20] sm:$0xff]
    %v287 = vld [vmem:[#allocation7 + $0x28] sm:$0xff]
    %v288 = vld [vmem:[#allocation7 + $0x30] sm:$0xff]
    %v289 = vld [vmem:[#allocation7 + $0x38] sm:$0xff]
    %v290 = vld [vmem:[#allocation7 + $0x40] sm:$0xff]
    %v291 = vld [vmem:[#allocation7 + $0x48] sm:$0xff]
    %v292 = vld [vmem:[#allocation7 + $0x50] sm:$0xff]
    %v293 = vld [vmem:[#allocation7 + $0x58] sm:$0xff]
    %v294 = vld [vmem:[#allocation7 + $0x60] sm:$0xff]
    %v295 = vld [vmem:[#allocation7 + $0x68] sm:$0xff]
    %v296 = vld [vmem:[#allocation7 + $0x70] sm:$0xff]
    %v297 = vld [vmem:[#allocation7 + $0x78] sm:$0xff]
    %v298 = vld [vmem:[%s4] sm:$0x1]
    %v300 = vlaneseq
    %v301 = vshrl.u32 %v300, 7
    %v302 = vsub.s32 0, %v301
    %v303 = vrot.slane %v298, %v302
    %305 = vmatprep.subr.mxu0 0.0
    %306 = vmatpush1.xpose.msra.mxu0 %v282
    %307 = vmatprep.subr.mxu0 0.0
    %308 = vmatpush1.xpose.msra.mxu0 %v283
    %309 = vmatprep.subr.mxu0 0.0
    %310 = vmatpush1.xpose.msra.mxu0 %v284
    %311 = vmatprep.subr.mxu0 0.0
    %312 = vmatpush1.xpose.msra.mxu0 %v285
    %313 = vmatprep.subr.mxu0 0.0
    %314 = vmatpush1.xpose.msra.mxu0 %v286
    %315 = vmatprep.subr.mxu0 0.0
    %316 = vmatpush1.xpose.msra.mxu0 %v287
    %317 = vmatprep.subr.mxu0 0.0
    %318 = vmatpush1.xpose.msra.mxu0 %v288
    %319 = vmatprep.subr.mxu0 0.0
    %320 = vmatpush1.xpose.msra.mxu0 %v289
    %321 = vmatprep.subr.mxu0 0.0
    %322 = vmatpush1.xpose.msra.mxu0 %v290
    %323 = vmatprep.subr.mxu0 0.0
    %324 = vmatpush1.xpose.msra.mxu0 %v291
    %325 = vmatprep.subr.mxu0 0.0
    %326 = vmatpush1.xpose.msra.mxu0 %v292
    %327 = vmatprep.subr.mxu0 0.0
    %328 = vmatpush1.xpose.msra.mxu0 %v293
    %329 = vmatprep.subr.mxu0 0.0
    %330 = vmatpush1.xpose.msra.mxu0 %v294
    %331 = vmatprep.subr.mxu0 0.0
    %332 = vmatpush1.xpose.msra.mxu0 %v295
    %333 = vmatprep.subr.mxu0 0.0
    %334 = vmatpush1.xpose.msra.mxu0 %v296
    %335 = vmatprep.subr.mxu0 0.0
    %336 = vmatpush1.xpose.msra.mxu0 %v297
    %337 = vmatprep.subr.mxu0 0.0
    %338 = vmatpush1.xpose.msra.mxu0 0.0
    %339 = vmatprep.subr.mxu0 0.0
    %340 = vmatpush1.xpose.msra.mxu0 0.0
    %341 = vmatprep.subr.mxu0 0.0
    %342 = vmatpush1.xpose.msra.mxu0 0.0
    %343 = vmatprep.subr.mxu0 0.0
    %344 = vmatpush1.xpose.msra.mxu0 0.0
    %345 = vmatprep.subr.mxu0 0.0
    %346 = vmatpush1.xpose.msra.mxu0 0.0
    %347 = vmatprep.subr.mxu0 0.0
    %348 = vmatpush1.xpose.msra.mxu0 0.0
    %349 = vmatprep.subr.mxu0 0.0
    %350 = vmatpush1.xpose.msra.mxu0 0.0
    %351 = vmatprep.subr.mxu0 0.0
    %352 = vmatpush1.xpose.msra.mxu0 0.0
    %353 = vmatprep.subr.mxu0 0.0
    %354 = vmatpush1.xpose.msra.mxu0 0.0
    %355 = vmatprep.subr.mxu0 0.0
    %356 = vmatpush1.xpose.msra.mxu0 0.0
    %357 = vmatprep.subr.mxu0 0.0
    %358 = vmatpush1.xpose.msra.mxu0 0.0
    %359 = vmatprep.subr.mxu0 0.0
    %360 = vmatpush1.xpose.msra.mxu0 0.0
    %361 = vmatprep.subr.mxu0 0.0
    %362 = vmatpush1.xpose.msra.mxu0 0.0
    %363 = vmatprep.subr.mxu0 0.0
    %364 = vmatpush1.xpose.msra.mxu0 0.0
    %365 = vmatprep.subr.mxu0 0.0
    %366 = vmatpush1.xpose.msra.mxu0 0.0
    %367 = vmatprep.subr.mxu0 0.0
    %368 = vmatpush1.xpose.msra.mxu0 0.0
    %369 = vmatprep.mubr.f32.mxu0 0.0
    %370 = vmatmul.mubr.f32.gmra.mrb[0].mxu0 %v266
    %v371 = vpop.f32.mrb[0].mxu0
    %v372 = vadd.f32 %v303, %v371
    %v373 = vpop.f32.mrb[0].mxu0
    %374 = vmatprep.mubr.f32.mxu0 0.0
    %375 = vmatmul.mubr.f32.gmra.mrb[0].mxu0 %v267
    %v376 = vpop.f32.mrb[0].mxu0
    %v377 = vadd.f32 %v303, %v376
    %v378 = vpop.f32.mrb[0].mxu0
    %379 = vmatprep.mubr.f32.mxu0 0.0
    %380 = vmatmul.mubr.f32.gmra.mrb[0].mxu0 %v268
    %v381 = vpop.f32.mrb[0].mxu0
    %v382 = vadd.f32 %v303, %v381
    %v383 = vpop.f32.mrb[0].mxu0
    %384 = vmatprep.mubr.f32.mxu0 0.0
    %385 = vmatmul.mubr.f32.gmra.mrb[0].mxu0 %v269
    %v386 = vpop.f32.mrb[0].mxu0
    %v387 = vadd.f32 %v303, %v386
    %v388 = vpop.f32.mrb[0].mxu0
    %389 = vmatprep.mubr.f32.mxu0 0.0
    %390 = vmatmul.mubr.f32.gmra.mrb[0].mxu0 %v270
    %v391 = vpop.f32.mrb[0].mxu0
    %v392 = vadd.f32 %v303, %v391
    %v393 = vpop.f32.mrb[0].mxu0
    %394 = vmatprep.mubr.f32.mxu0 0.0
    %395 = vmatmul.mubr.f32.gmra.mrb[0].mxu0 %v271
    %v396 = vpop.f32.mrb[0].mxu0
    %v397 = vadd.f32 %v303, %v396
    %v398 = vpop.f32.mrb[0].mxu0
    %399 = vmatprep.mubr.f32.mxu0 0.0
    %400 = vmatmul.mubr.f32.gmra.mrb[0].mxu0 %v272
    %v401 = vpop.f32.mrb[0].mxu0
    %v402 = vadd.f32 %v303, %v401
    %v403 = vpop.f32.mrb[0].mxu0
    %404 = vmatprep.mubr.f32.mxu0 0.0
    %405 = vmatmul.mubr.f32.gmra.mrb[0].mxu0 %v273
    %v406 = vpop.f32.mrb[0].mxu0
    %v407 = vadd.f32 %v303, %v406
    %v408 = vpop.f32.mrb[0].mxu0
    %409 = vmatprep.mubr.f32.mxu0 0.0
    %410 = vmatmul.mubr.f32.gmra.mrb[0].mxu0 %v274
    %v411 = vpop.f32.mrb[0].mxu0
    %v412 = vadd.f32 %v303, %v411
    %v413 = vpop.f32.mrb[0].mxu0
    %414 = vmatprep.mubr.f32.mxu0 0.0
    %415 = vmatmul.mubr.f32.gmra.mrb[0].mxu0 %v275
    %v416 = vpop.f32.mrb[0].mxu0
    %v417 = vadd.f32 %v303, %v416
    %v418 = vpop.f32.mrb[0].mxu0
    %419 = vmatprep.mubr.f32.mxu0 0.0
    %420 = vmatmul.mubr.f32.gmra.mrb[0].mxu0 %v276
    %v421 = vpop.f32.mrb[0].mxu0
    %v422 = vadd.f32 %v303, %v421
    %v423 = vpop.f32.mrb[0].mxu0
    %424 = vmatprep.mubr.f32.mxu0 0.0
    %425 = vmatmul.mubr.f32.gmra.mrb[0].mxu0 %v277
    %v426 = vpop.f32.mrb[0].mxu0
    %v427 = vadd.f32 %v303, %v426
    %v428 = vpop.f32.mrb[0].mxu0
    %429 = vmatprep.mubr.f32.mxu0 0.0
    %430 = vmatmul.mubr.f32.gmra.mrb[0].mxu0 %v278
    %v431 = vpop.f32.mrb[0].mxu0
    %v432 = vadd.f32 %v303, %v431
    %v433 = vpop.f32.mrb[0].mxu0
    %434 = vmatprep.mubr.f32.mxu0 0.0
    %435 = vmatmul.mubr.f32.gmra.mrb[0].mxu0 %v279
    %v436 = vpop.f32.mrb[0].mxu0
    %v437 = vadd.f32 %v303, %v436
    %v438 = vpop.f32.mrb[0].mxu0
    %439 = vmatprep.mubr.f32.mxu0 0.0
    %440 = vmatmul.mubr.f32.gmra.mrb[0].mxu0 %v280
    %v441 = vpop.f32.mrb[0].mxu0
    %v442 = vadd.f32 %v303, %v441
    %v443 = vpop.f32.mrb[0].mxu0
    %444 = vmatprep.mubr.f32.mxu0 0.0
    %445 = vmatmul.mubr.f32.gmra.mrb[0].mxu0 %v281
    %v446 = vpop.f32.mrb[0].mxu0
    %v447 = vadd.f32 %v303, %v446
    %v448 = vpop.f32.mrb[0].mxu0
    %449 = vdwg.mxu0
    %v450 = vmax.f32 %v372, 0.0
    %v451 = vmax.f32 %v377, 0.0
    %v452 = vmax.f32 %v382, 0.0
    %v453 = vmax.f32 %v387, 0.0
    %v454 = vmax.f32 %v392, 0.0
    %v455 = vmax.f32 %v397, 0.0
    %v456 = vmax.f32 %v402, 0.0
    %v457 = vmax.f32 %v407, 0.0
    %v458 = vmax.f32 %v412, 0.0
    %v459 = vmax.f32 %v417, 0.0
    %v460 = vmax.f32 %v422, 0.0
    %v461 = vmax.f32 %v427, 0.0
    %v462 = vmax.f32 %v432, 0.0
    %v463 = vmax.f32 %v437, 0.0
    %v464 = vmax.f32 %v442, 0.0
    %v465 = vmax.f32 %v447, 0.0
    %v466 = vld [vmem:[#allocation8] sm:$0xff]
    %v467 = vld [vmem:[#allocation8 + $0x8] sm:$0xff]
    %v468 = vld [vmem:[#allocation8 + $0x10] sm:$0xff]
    %v469 = vld [vmem:[#allocation8 + $0x18] sm:$0xff]
    %v470 = vld [vmem:[#allocation8 + $0x20] sm:$0xff]
    %v471 = vld [vmem:[#allocation8 + $0x28] sm:$0xff]
    %v472 = vld [vmem:[#allocation8 + $0x30] sm:$0xff]
    %v473 = vld [vmem:[#allocation8 + $0x38] sm:$0xff]
    %v474 = vld [vmem:[#allocation8 + $0x40] sm:$0xff]
    %v475 = vld [vmem:[#allocation8 + $0x48] sm:$0xff]
    %v476 = vld [vmem:[#allocation8 + $0x50] sm:$0xff]
    %v477 = vld [vmem:[#allocation8 + $0x58] sm:$0xff]
    %v478 = vld [vmem:[#allocation8 + $0x60] sm:$0xff]
    %v479 = vld [vmem:[#allocation8 + $0x68] sm:$0xff]
    %v480 = vld [vmem:[#allocation8 + $0x70] sm:$0xff]
    %v481 = vld [vmem:[#allocation8 + $0x78] sm:$0xff]
    %v482 = vld [vmem:[%s6] sm:$0x1]
    %v484 = vlaneseq
    %v485 = vshrl.u32 %v484, 7
    %v486 = vsub.s32 0, %v485
    %v487 = vrot.slane %v482, %v486
    %489 = vmatprep.subr.mxu0 0.0
    %490 = vmatpush1.xpose.msra.mxu0 %v466
    %491 = vmatprep.subr.mxu0 0.0
    %492 = vmatpush1.xpose.msra.mxu0 %v467
    %493 = vmatprep.subr.mxu0 0.0
    %494 = vmatpush1.xpose.msra.mxu0 %v468
    %495 = vmatprep.subr.mxu0 0.0
    %496 = vmatpush1.xpose.msra.mxu0 %v469
    %497 = vmatprep.subr.mxu0 0.0
    %498 = vmatpush1.xpose.msra.mxu0 %v470
    %499 = vmatprep.subr.mxu0 0.0
    %500 = vmatpush1.xpose.msra.mxu0 %v471
    %501 = vmatprep.subr.mxu0 0.0
    %502 = vmatpush1.xpose.msra.mxu0 %v472
    %503 = vmatprep.subr.mxu0 0.0
    %504 = vmatpush1.xpose.msra.mxu0 %v473
    %505 = vmatprep.subr.mxu0 0.0
    %506 = vmatpush1.xpose.msra.mxu0 %v474
    %507 = vmatprep.subr.mxu0 0.0
    %508 = vmatpush1.xpose.msra.mxu0 %v475
    %509 = vmatprep.subr.mxu0 0.0
    %510 = vmatpush1.xpose.msra.mxu0 %v476
    %511 = vmatprep.subr.mxu0 0.0
    %512 = vmatpush1.xpose.msra.mxu0 %v477
    %513 = vmatprep.subr.mxu0 0.0
    %514 = vmatpush1.xpose.msra.mxu0 %v478
    %515 = vmatprep.subr.mxu0 0.0
    %516 = vmatpush1.xpose.msra.mxu0 %v479
    %517 = vmatprep.subr.mxu0 0.0
    %518 = vmatpush1.xpose.msra.mxu0 %v480
    %519 = vmatprep.subr.mxu0 0.0
    %520 = vmatpush1.xpose.msra.mxu0 %v481
    %521 = vmatprep.subr.mxu0 0.0
    %522 = vmatpush1.xpose.msra.mxu0 0.0
    %523 = vmatprep.subr.mxu0 0.0
    %524 = vmatpush1.xpose.msra.mxu0 0.0
    %525 = vmatprep.subr.mxu0 0.0
    %526 = vmatpush1.xpose.msra.mxu0 0.0
    %527 = vmatprep.subr.mxu0 0.0
    %528 = vmatpush1.xpose.msra.mxu0 0.0
    %529 = vmatprep.subr.mxu0 0.0
    %530 = vmatpush1.xpose.msra.mxu0 0.0
    %531 = vmatprep.subr.mxu0 0.0
    %532 = vmatpush1.xpose.msra.mxu0 0.0
    %533 = vmatprep.subr.mxu0 0.0
    %534 = vmatpush1.xpose.msra.mxu0 0.0
    %535 = vmatprep.subr.mxu0 0.0
    %536 = vmatpush1.xpose.msra.mxu0 0.0
    %537 = vmatprep.subr.mxu0 0.0
    %538 = vmatpush1.xpose.msra.mxu0 0.0
    %539 = vmatprep.subr.mxu0 0.0
    %540 = vmatpush1.xpose.msra.mxu0 0.0
    %541 = vmatprep.subr.mxu0 0.0
    %542 = vmatpush1.xpose.msra.mxu0 0.0
    %543 = vmatprep.subr.mxu0 0.0
    %544 = vmatpush1.xpose.msra.mxu0 0.0
    %545 = vmatprep.subr.mxu0 0.0
    %546 = vmatpush1.xpose.msra.mxu0 0.0
    %547 = vmatprep.subr.mxu0 0.0
    %548 = vmatpush1.xpose.msra.mxu0 0.0
    %549 = vmatprep.subr.mxu0 0.0
    %550 = vmatpush1.xpose.msra.mxu0 0.0
    %551 = vmatprep.subr.mxu0 0.0
    %552 = vmatpush1.xpose.msra.mxu0 0.0
    %553 = vmatprep.mubr.f32.mxu0 0.0
    %554 = vmatmul.mubr.f32.gmra.mrb[0].mxu0 %v450
    %v555 = vpop.f32.mrb[0].mxu0
    %v556 = vadd.f32 %v487, %v555
    %v557 = vpop.f32.mrb[0].mxu0
    %558 = vmatprep.mubr.f32.mxu0 0.0
    %559 = vmatmul.mubr.f32.gmra.mrb[0].mxu0 %v451
    %v560 = vpop.f32.mrb[0].mxu0
    %v561 = vadd.f32 %v487, %v560
    %v562 = vpop.f32.mrb[0].mxu0
    %563 = vmatprep.mubr.f32.mxu0 0.0
    %564 = vmatmul.mubr.f32.gmra.mrb[0].mxu0 %v452
    %v565 = vpop.f32.mrb[0].mxu0
    %v566 = vadd.f32 %v487, %v565
    %v567 = vpop.f32.mrb[0].mxu0
    %568 = vmatprep.mubr.f32.mxu0 0.0
    %569 = vmatmul.mubr.f32.gmra.mrb[0].mxu0 %v453
    %v570 = vpop.f32.mrb[0].mxu0
    %v571 = vadd.f32 %v487, %v570
    %v572 = vpop.f32.mrb[0].mxu0
    %573 = vmatprep.mubr.f32.mxu0 0.0
    %574 = vmatmul.mubr.f32.gmra.mrb[0].mxu0 %v454
    %v575 = vpop.f32.mrb[0].mxu0
    %v576 = vadd.f32 %v487, %v575
    %v577 = vpop.f32.mrb[0].mxu0
    %578 = vmatprep.mubr.f32.mxu0 0.0
    %579 = vmatmul.mubr.f32.gmra.mrb[0].mxu0 %v455
    %v580 = vpop.f32.mrb[0].mxu0
    %v581 = vadd.f32 %v487, %v580
    %v582 = vpop.f32.mrb[0].mxu0
    %583 = vmatprep.mubr.f32.mxu0 0.0
    %584 = vmatmul.mubr.f32.gmra.mrb[0].mxu0 %v456
    %v585 = vpop.f32.mrb[0].mxu0
    %v586 = vadd.f32 %v487, %v585
    %v587 = vpop.f32.mrb[0].mxu0
    %588 = vmatprep.mubr.f32.mxu0 0.0
    %589 = vmatmul.mubr.f32.gmra.mrb[0].mxu0 %v457
    %v590 = vpop.f32.mrb[0].mxu0
    %v591 = vadd.f32 %v487, %v590
    %v592 = vpop.f32.mrb[0].mxu0
    %593 = vmatprep.mubr.f32.mxu0 0.0
    %594 = vmatmul.mubr.f32.gmra.mrb[0].mxu0 %v458
    %v595 = vpop.f32.mrb[0].mxu0
    %v596 = vadd.f32 %v487, %v595
    %v597 = vpop.f32.mrb[0].mxu0
    %598 = vmatprep.mubr.f32.mxu0 0.0
    %599 = vmatmul.mubr.f32.gmra.mrb[0].mxu0 %v459
    %v600 = vpop.f32.mrb[0].mxu0
    %v601 = vadd.f32 %v487, %v600
    %v602 = vpop.f32.mrb[0].mxu0
    %603 = vmatprep.mubr.f32.mxu0 0.0
    %604 = vmatmul.mubr.f32.gmra.mrb[0].mxu0 %v460
    %v605 = vpop.f32.mrb[0].mxu0
    %v606 = vadd.f32 %v487, %v605
    %v607 = vpop.f32.mrb[0].mxu0
    %608 = vmatprep.mubr.f32.mxu0 0.0
    %609 = vmatmul.mubr.f32.gmra.mrb[0].mxu0 %v461
    %v610 = vpop.f32.mrb[0].mxu0
    %v611 = vadd.f32 %v487, %v610
    %v612 = vpop.f32.mrb[0].mxu0
    %613 = vmatprep.mubr.f32.mxu0 0.0
    %614 = vmatmul.mubr.f32.gmra.mrb[0].mxu0 %v462
    %v615 = vpop.f32.mrb[0].mxu0
    %v616 = vadd.f32 %v487, %v615
    %v617 = vpop.f32.mrb[0].mxu0
    %618 = vmatprep.mubr.f32.mxu0 0.0
    %619 = vmatmul.mubr.f32.gmra.mrb[0].mxu0 %v463
    %v620 = vpop.f32.mrb[0].mxu0
    %v621 = vadd.f32 %v487, %v620
    %v622 = vpop.f32.mrb[0].mxu0
    %623 = vmatprep.mubr.f32.mxu0 0.0
    %624 = vmatmul.mubr.f32.gmra.mrb[0].mxu0 %v464
    %v625 = vpop.f32.mrb[0].mxu0
    %v626 = vadd.f32 %v487, %v625
    %v627 = vpop.f32.mrb[0].mxu0
    %628 = vmatprep.mubr.f32.mxu0 0.0
    %629 = vmatmul.mubr.f32.gmra.mrb[0].mxu0 %v465
    %v630 = vpop.f32.mrb[0].mxu0
    %v631 = vadd.f32 %v487, %v630
    %v632 = vpop.f32.mrb[0].mxu0
    %633 = vdwg.mxu0
    %v634 = vmax.f32 %v556, %v576
    %v635 = vmax.f32 %v561, %v581
    %v636 = vmax.f32 %v566, %v586
    %v637 = vmax.f32 %v571, %v591
    %v638 = vmax.f32 %v634, %v596
    %v639 = vmax.f32 %v635, %v601
    %v640 = vmax.f32 %v636, %v606
    %v641 = vmax.f32 %v637, %v611
    %v642 = vmax.f32 %v638, %v616
    %v643 = vmax.f32 %v639, %v621
    %v644 = vmax.f32 %v640, %v626
    %v645 = vmax.f32 %v641, %v631
    %v646 = vmax.f32 %v642, %v643
    %v647 = vmax.f32 %v644, %v645
    %v648 = vmax.f32 %v646, %v647
    %v649 = vrot.slane %v648, 4
    %v650 = vmax.f32 %v648, %v649
    %v651 = vrot.slane %v650, 2
    %v652 = vmax.f32 %v650, %v651
    %v653 = vrot.slane %v652, 1
    %v654 = vmax.f32 %v652, %v653
    %v655 = vsub.f32 %v556, %v654
    %v656 = vsub.f32 %v561, %v654
    %v657 = vsub.f32 %v566, %v654
    %v658 = vsub.f32 %v571, %v654
    %v659 = vsub.f32 %v576, %v654
    %v660 = vsub.f32 %v581, %v654
    %v661 = vsub.f32 %v586, %v654
    %v662 = vsub.f32 %v591, %v654
    %v663 = vsub.f32 %v596, %v654
    %v664 = vsub.f32 %v601, %v654
    %v665 = vsub.f32 %v606, %v654
    %v666 = vsub.f32 %v611, %v654
    %v667 = vsub.f32 %v616, %v654
    %v668 = vsub.f32 %v621, %v654
    %v669 = vsub.f32 %v626, %v654
    %v670 = vsub.f32 %v631, %v654
    %v671 = vmul.f32 %v655, 1.442695
    %v672 = vpow.pop %v671
    %v673 = vmul.f32 %v656, 1.442695
    %v674 = vpow.pop %v673
    %v675 = vmul.f32 %v657, 1.442695
    %v676 = vpow.pop %v675
    %v677 = vmul.f32 %v658, 1.442695
    %v678 = vpow.pop %v677
    %v679 = vmul.f32 %v659, 1.442695
    %v680 = vpow.pop %v679
    %v681 = vmul.f32 %v660, 1.442695
    %v682 = vpow.pop %v681
    %v683 = vmul.f32 %v661, 1.442695
    %v684 = vpow.pop %v683
    %v685 = vmul.f32 %v662, 1.442695
    %v686 = vpow.pop %v685
    %v687 = vmul.f32 %v663, 1.442695
    %v688 = vpow.pop %v687
    %v689 = vmul.f32 %v664, 1.442695
    %v690 = vpow.pop %v689
    %v691 = vmul.f32 %v665, 1.442695
    %v692 = vpow.pop %v691
    %v693 = vmul.f32 %v666, 1.442695
    %v694 = vpow.pop %v693
    %v695 = vmul.f32 %v667, 1.442695
    %v696 = vpow.pop %v695
    %v697 = vmul.f32 %v668, 1.442695
    %v698 = vpow.pop %v697
    %v699 = vmul.f32 %v669, 1.442695
    %v700 = vpow.pop %v699
    %v701 = vmul.f32 %v670, 1.442695
    %v702 = vpow.pop %v701
    %v703 = vadd.f32 %v672, %v674
    %v704 = vadd.f32 %v703, %v676
    %v705 = vadd.f32 %v704, %v678
    %v706 = vadd.f32 %v705, %v680
    %v707 = vadd.f32 %v706, %v682
    %v708 = vadd.f32 %v707, %v684
    %v709 = vadd.f32 %v708, %v686
    %v710 = vadd.f32 %v709, %v688
    %v711 = vadd.f32 %v710, %v690
    %v712 = vadd.f32 %v711, %v692
    %v713 = vadd.f32 %v712, %v694
    %v714 = vadd.f32 %v713, %v696
    %v715 = vadd.f32 %v714, %v698
    %v716 = vadd.f32 %v715, %v700
    %v717 = vadd.f32 %v716, %v702
    %v718 = vrot.slane %v717, 4
    %v719 = vadd.f32 %v717, %v718
    %v720 = vrot.slane %v719, 2
    %v721 = vadd.f32 %v719, %v720
    %v722 = vrot.slane %v721, 1
    %v723 = vadd.f32 %v721, %v722
    %v724 = vrcp.pop %v723
    %v725 = vmul.f32 %v672, %v724
    %v726 = vmul.f32 %v674, %v724
    %v727 = vmul.f32 %v676, %v724
    %v728 = vmul.f32 %v678, %v724
    %v729 = vmul.f32 %v680, %v724
    %v730 = vmul.f32 %v682, %v724
    %v731 = vmul.f32 %v684, %v724
    %v732 = vmul.f32 %v686, %v724
    %v733 = vmul.f32 %v688, %v724
    %v734 = vmul.f32 %v690, %v724
    %v735 = vmul.f32 %v692, %v724
    %v736 = vmul.f32 %v694, %v724
    %v737 = vmul.f32 %v696, %v724
    %v738 = vmul.f32 %v698, %v724
    %v739 = vmul.f32 %v700, %v724
    %v740 = vmul.f32 %v702, %v724
    %741 = vst [vmem:[#allocation10] sm:$0xff] %v725
    %742 = vst [vmem:[#allocation10 + $0x8] sm:$0xff] %v726
    %743 = vst [vmem:[#allocation10 + $0x10] sm:$0xff] %v727
    %744 = vst [vmem:[#allocation10 + $0x18] sm:$0xff] %v728
    %745 = vst [vmem:[#allocation10 + $0x20] sm:$0xff] %v729
    %746 = vst [vmem:[#allocation10 + $0x28] sm:$0xff] %v730
    %747 = vst [vmem:[#allocation10 + $0x30] sm:$0xff] %v731
    %748 = vst [vmem:[#allocation10 + $0x38] sm:$0xff] %v732
    %749 = vst [vmem:[#allocation10 + $0x40] sm:$0xff] %v733
    %750 = vst [vmem:[#allocation10 + $0x48] sm:$0xff] %v734
    %751 = vst [vmem:[#allocation10 + $0x50] sm:$0xff] %v735
    %752 = vst [vmem:[#allocation10 + $0x58] sm:$0xff] %v736
    %753 = vst [vmem:[#allocation10 + $0x60] sm:$0xff] %v737
    %754 = vst [vmem:[#allocation10 + $0x68] sm:$0xff] %v738
    %755 = vst [vmem:[#allocation10 + $0x70] sm:$0xff] %v739
    %756 = vst [vmem:[#allocation10 + $0x78] sm:$0xff] %v740
    // Predicated region
    $region46: #{tpu_custom_call.1} parent=1 // pred_check
      _
    $region47: #{tpu_custom_call.1} parent=1 // pred_check_branch
      %758 = sbr.rel (0) target = $region49
    $region48: #{tpu_custom_call.1} parent=1 // pred_region
      %s760 = ssub.s32 2048, 2048
      %761 = vsyncadd [#allocation4], %s760
      %s762 = sshll.u32 [#allocation10], 4
      %s763 = int_to_ptr.vmem [resolvable:$true] %s762
      %768 = dma.vmem_to_hbm [thread:$0]  %s763, 2048, %s7, [#allocation4], 128, 128, 8
    $region49: #{tpu_custom_call.1} parent=1 // pred_fallthru
      _
    // Predicated region
    $region50: #{tpu_custom_call.1} parent=1 // pred_check
      _
    $region51: #{tpu_custom_call.1} parent=1 // pred_check_branch
      %770 = sbr.rel (0) target = $region53
    $region52: #{tpu_custom_call.1} parent=1 // pred_region
      %771 = dma.done [#allocation4], 2048
    $region53: #{tpu_custom_call.1} parent=1 // pred_fallthru
      _
    %772 = vsyncpa [#allocation3], 1
    %773 = vsyncpa [#allocation6], 1
    %774 = vsyncpa [#allocation9], 1
    %775 = vsyncpa [#allocation4], 1

</llo_original>
